<compile_context>
chip_gen: v5e
topology: v5e:2x2
jax: 0.10.0
libtpu: 0.0.40
codegen_flags: <defaults>
</compile_context>

<pallas_src>
import functools
import math

import jax
import jax.numpy as jnp
from jax.experimental import pallas as pl
from jax.experimental.pallas import tpu as pltpu


def _round_up(x: int, m: int) -> int:
    return ((x + m - 1) // m) * m


# ----------------------------- kernels ------------------------------------


def _apply_activation(y, activation):
    if activation == "tanh":
        return jnp.tanh(y)
    elif activation == "sigmoid":
        # EUP-only sigmoid: 1/(1+exp(-y)) == 0.5*(tanh(y/2)+1), avoids the
        # full-precision VPU divide that jax.nn.sigmoid lowers to.
        return 0.5 * (jnp.tanh(0.5 * y) + 1.0)
    raise ValueError(f"unsupported activation: {activation}")


def _disentangler_kernel_single_k(x_ref, w_ref, b_ref, o_ref, *, activation):
    # x_ref: (tm, tk) bf16   w_ref: (tk, tn) bf16   b_ref: (1, tn) f32
    # Single K step: no accumulator scratch, write the output directly.
    y = jnp.dot(x_ref[...], w_ref[...], preferred_element_type=jnp.float32)
    y = y + b_ref[...]
    o_ref[...] = _apply_activation(y, activation).astype(o_ref.dtype)


def _disentangler_kernel_k_split(x_ref, w_ref, b_ref, o_ref, acc_ref, *,
                                 activation):
    # Multi K step: f32 VMEM accumulator, epilogue fused on the last step.
    k = pl.program_id(2)

    @pl.when(k == 0)
    def _():
        acc_ref[...] = jnp.zeros_like(acc_ref)

    acc_ref[...] += jnp.dot(x_ref[...], w_ref[...],
                            preferred_element_type=jnp.float32)

    @pl.when(k == pl.num_programs(2) - 1)
    def _():
        y = acc_ref[...] + b_ref[...]
        o_ref[...] = _apply_activation(y, activation).astype(o_ref.dtype)


# --------------------------- tile selection --------------------------------

_TILE_VMEM_BUDGET = 20 * 1024 * 1024      # double-buffered tile budget (safe on v7x)
_DEFAULT_RESIDENT_W_BYTES = 6 * 1024 * 1024  # bf16 weight bytes to keep VMEM-resident


def _pick_tm(batch: int, cap: int) -> int:
    cap = max(16, _round_up(min(cap, 512), 16))
    b16 = _round_up(batch, 16)
    if b16 <= 128:
        return min(b16, cap)
    cands = [t for t in (128, 256, 512) if t <= cap]
    if not cands:
        cands = [cap]
    # minimize padded rows, tie-break larger tile (fewer grid steps)
    return min(cands, key=lambda t: (_round_up(batch, t) - batch, -t))


def _pick_tile_128(dim_padded: int, cap: int) -> int:
    # dim_padded is a multiple of 128; pick a multiple-of-128 tile <= cap that
    # minimizes extra padding from the tile not dividing dim_padded.
    cap = max(128, (min(cap, dim_padded) // 128) * 128)
    best = None
    for t in range(128, cap + 1, 128):
        key = (_round_up(dim_padded, t) - dim_padded, -t)
        if best is None or key < best[0]:
            best = (key, t)
    return best[1]


def _vmem_estimate(tm, tn, tk, gk, out_itemsize):
    bf = 2  # bf16 operand bytes
    est = 2 * tm * tk * bf           # x tile, double-buffered
    est += 2 * tk * tn * bf          # weight tile, double-buffered
    est += 2 * tn * 4                # bias tile
    est += 2 * tm * tn * out_itemsize  # output tile
    if gk > 1:
        est += tm * tn * 4           # f32 accumulator scratch
    return est


# ------------------------------ wrapper -------------------------------------


def disentangler_forward(x, weight, bias, activation="tanh", *,
                         tm_cap=512, tn_cap=512, tk_cap=1024,
                         max_resident_weight_bytes=_DEFAULT_RESIDENT_W_BYTES):
    """Pallas equivalent of: activation(x @ weight.T + bias).

    Args:
      x:      (B, in_dim)
      weight: (out_dim, in_dim)   (PyTorch nn.Linear convention)
      bias:   (out_dim,)
      activation: "tanh" or "sigmoid"
    Returns:
      (B, out_dim) array with x.dtype.
    """
    if activation not in ("tanh", "sigmoid"):
        raise ValueError(f"unsupported activation: {activation}")

    B, in_dim = x.shape
    out_dim, in_dim_w = weight.shape
    assert in_dim == in_dim_w, (in_dim, in_dim_w)
    assert bias.shape == (out_dim,)

    out_dtype = x.dtype
    out_itemsize = jnp.dtype(out_dtype).itemsize

    # Lane-padded problem dims.
    K0 = _round_up(in_dim, 128)
    N0 = _round_up(out_dim, 128)

    # Weight-resident fast path: whole bf16 weight fits VMEM -> fetch once.
    resident = (K0 * N0 * 2) <= max_resident_weight_bytes
    if resident:
        tk, tn = K0, N0
    else:
        tk = _pick_tile_128(K0, tk_cap)
        tn = _pick_tile_128(N0, tn_cap)

    tm = _pick_tm(B, tm_cap)

    Kp = _round_up(in_dim, tk)
    Np = _round_up(out_dim, tn)
    Bp = _round_up(B, tm)
    gk = Kp // tk

    # Shrink tm if the double-buffered VMEM estimate exceeds the budget
    # (keeps headroom on v7x's 64 MiB physical VMEM).
    while _vmem_estimate(tm, tn, tk, gk, out_itemsize) > _TILE_VMEM_BUDGET and tm > 16:
        tm = max(16, _round_up(tm // 2, 16))
        Bp = _round_up(B, tm)

    gi, gj = Bp // tm, Np // tn

    # v7x has 2 TensorCores: keep >=2 steps on a parallel axis when possible.
    if gi == 1 and gj == 1 and B >= 32:
        tm_new = _round_up(math.ceil(B / 2), 16)
        if tm_new < tm:
            tm = tm_new
            Bp = _round_up(B, tm)
            gi = Bp // tm

    grid = (gi, gj, gk)

    # Wrapper-side prep (cast to bf16 + transpose + pad; fused by XLA).
    # TODO(synk): for very large memory-bound x the pad round-trip could be
    # replaced with an in-kernel K-tail mask; weight/bias prep can be hoisted
    # out of the per-call path when parameters are static.
    xp = x.astype(jnp.bfloat16)
    if (Bp, Kp) != (B, in_dim):
        xp = jnp.pad(xp, ((0, Bp - B), (0, Kp - in_dim)))
    wt = weight.T.astype(jnp.bfloat16)          # (in_dim, out_dim): one-time transpose
    if (Kp, Np) != (in_dim, out_dim):
        wt = jnp.pad(wt, ((0, Kp - in_dim), (0, Np - out_dim)))
    b2d = bias.astype(jnp.float32).reshape(1, out_dim)
    if Np != out_dim:
        b2d = jnp.pad(b2d, ((0, 0), (0, Np - out_dim)))

    if gk == 1:
        kernel = functools.partial(_disentangler_kernel_single_k,
                                   activation=activation)
        scratch_shapes = []
    else:
        kernel = functools.partial(_disentangler_kernel_k_split,
                                   activation=activation)
        scratch_shapes = [pltpu.VMEM((tm, tn), jnp.float32)]

    est = _vmem_estimate(tm, tn, tk, gk, out_itemsize)
    vmem_limit = int(min(48 * 1024 * 1024, max(32 * 1024 * 1024, 2 * est)))

    out_padded = pl.pallas_call(
        kernel,
        out_shape=jax.ShapeDtypeStruct((Bp, Np), out_dtype),
        grid_spec=pltpu.PrefetchScalarGridSpec(
            num_scalar_prefetch=0,
            grid=grid,
            in_specs=[
                pl.BlockSpec((tm, tk), lambda i, j, k: (i, k)),   # x tile
                pl.BlockSpec((tk, tn), lambda i, j, k: (k, j)),   # weight tile
                pl.BlockSpec((1, tn), lambda i, j, k: (0, j)),    # bias tile
            ],
            out_specs=pl.BlockSpec((tm, tn), lambda i, j, k: (i, j)),
            scratch_shapes=scratch_shapes,
        ),
        compiler_params=pltpu.CompilerParams(
            dimension_semantics=("parallel", "parallel", "arbitrary"),
            vmem_limit_bytes=vmem_limit,
        ),
    )(xp, wt, b2d)

    return out_padded[:B, :out_dim]


def reference_forward(x, weight, bias, activation="tanh"):
    y = jnp.dot(x, weight.T, preferred_element_type=jnp.float32) + bias
    return jnp.tanh(y) if activation == "tanh" else jax.nn.sigmoid(y)


if __name__ == "__main__":
    key = jax.random.PRNGKey(0)
    ks = jax.random.split(key, 6)

    # Small shape matching the module's forward (Linear in_dim -> out_dim).
    batch, in_dim, out_dim = 8, 32, 16
    x = jax.random.normal(ks[0], (batch, in_dim), dtype=jnp.float32)
    weight = jax.random.normal(ks[1], (out_dim, in_dim), dtype=jnp.float32) * 0.1
    bias = jax.random.normal(ks[2], (out_dim,), dtype=jnp.float32) * 0.1

    # bf16 operands on the MXU -> loosened tolerance (review-documented).
    for act in ("tanh", "sigmoid"):
        out = jax.block_until_ready(
            disentangler_forward(x, weight, bias, activation=act))
        ref = reference_forward(x, weight, bias, activation=act)
        assert out.shape == (batch, out_dim)
        assert jnp.allclose(out, ref, atol=2e-2, rtol=2e-2), act

    # Non-aligned shape: exercises padding/slicing + resident-weight single-K path.
    b2, i2, o2 = 20, 200, 150
    x2 = jax.random.normal(ks[3], (b2, i2), dtype=jnp.float32)
    w2 = jax.random.normal(ks[4], (o2, i2), dtype=jnp.float32) * 0.05
    bi2 = jax.random.normal(ks[5], (o2,), dtype=jnp.float32) * 0.05
    out2 = jax.block_until_ready(
        disentangler_forward(x2, w2, bi2, activation="tanh"))
    ref2 = reference_forward(x2, w2, bi2, activation="tanh")
    assert out2.shape == (b2, o2)
    assert jnp.allclose(out2, ref2, atol=2e-2, rtol=2e-2)

    # Force the streamed-weight / K-split accumulator path on the same shapes.
    out3 = jax.block_until_ready(
        disentangler_forward(x2, w2, bi2, activation="sigmoid",
                             max_resident_weight_bytes=0,
                             tn_cap=128, tk_cap=128))
    ref3 = reference_forward(x2, w2, bi2, activation="sigmoid")
    assert out3.shape == (b2, o2)
    assert jnp.allclose(out3, ref3, atol=2e-2, rtol=2e-2)

    print("KERNEL_OK")
</pallas_src>

<mosaic_0001>
module attributes {stable_mosaic.version = 11 : i64} {
  func.func @_disentangler_kernel_single_k(%arg0: i32, %arg1: i32, %arg2: i32, %arg3: memref<16x128xbf16, #tpu.memory_space<vmem>>, %arg4: memref<128x128xbf16, #tpu.memory_space<vmem>>, %arg5: memref<1x128xf32, #tpu.memory_space<vmem>>, %arg6: memref<16x128xf32, #tpu.memory_space<vmem>>) attributes {dimension_semantics = [#tpu.dimension_semantics<parallel>, #tpu.dimension_semantics<parallel>, #tpu.dimension_semantics<arbitrary>], iteration_bounds = array<i64: 1, 1, 1>, scalar_prefetch = 0 : i64, scratch_operands = 0 : i64, tpu.core_type = #tpu.core_type<tc>, window_params = [{transform_indices = @transform_0, window_bounds = array<i64: 16, 128>}, {transform_indices = @transform_1, window_bounds = array<i64: 128, 128>}, {transform_indices = @transform_2, window_bounds = array<i64: 1, 128>}, {transform_indices = @transform_3, window_bounds = array<i64: 16, 128>}]} {
    %c0 = arith.constant 0 : index
    %c0_0 = arith.constant 0 : index
    %0 = vector.load %arg3[%c0, %c0_0] : memref<16x128xbf16, #tpu.memory_space<vmem>>, vector<16x128xbf16>
    %c0_1 = arith.constant 0 : index
    %c0_2 = arith.constant 0 : index
    %1 = vector.load %arg4[%c0_1, %c0_2] : memref<128x128xbf16, #tpu.memory_space<vmem>>, vector<128x128xbf16>
    %cst = arith.constant dense<0.000000e+00> : vector<16x128xf32>
    %2 = tpu.matmul %0, %1, %cst {dimension_numbers = #tpu.dot_dimension_numbers<[1], [0], [0], [1], [0, 0, 1, 1], [], []>} : vector<16x128xbf16>, vector<128x128xbf16>, vector<16x128xf32> -> vector<16x128xf32>
    %c0_3 = arith.constant 0 : index
    %c0_4 = arith.constant 0 : index
    %3 = vector.load %arg5[%c0_3, %c0_4] : memref<1x128xf32, #tpu.memory_space<vmem>>, vector<1x128xf32>
    %4 = vector.broadcast %3 : vector<1x128xf32> to vector<16x128xf32>
    %5 = arith.addf %2, %4 : vector<16x128xf32>
    %6 = math.tanh %5 : vector<16x128xf32>
    %c0_5 = arith.constant 0 : index
    %c0_6 = arith.constant 0 : index
    %7 = vector.load %arg6[%c0_5, %c0_6] : memref<16x128xf32, #tpu.memory_space<vmem>>, vector<16x128xf32>
    tpu.vector_store %arg6[%c0_5, %c0_6], %6 {strides = array<i32>} : memref<16x128xf32, #tpu.memory_space<vmem>>, vector<16x128xf32>,
    return
  }
  func.func @transform_0(%arg0: i32, %arg1: i32, %arg2: i32) -> (i32, i32) {
    %c0_i32 = arith.constant 0 : i32
    return %arg0, %arg2 : i32, i32
  }
  func.func @transform_1(%arg0: i32, %arg1: i32, %arg2: i32) -> (i32, i32) {
    %c0_i32 = arith.constant 0 : i32
    return %arg2, %arg1 : i32, i32
  }
  func.func @transform_2(%arg0: i32, %arg1: i32, %arg2: i32) -> (i32, i32) {
    %c0_i32 = arith.constant 0 : i32
    %c0_i32_0 = arith.constant 0 : i32
    return %c0_i32, %arg1 : i32, i32
  }
  func.func @transform_3(%arg0: i32, %arg1: i32, %arg2: i32) -> (i32, i32) {
    %c0_i32 = arith.constant 0 : i32
    return %arg0, %arg1 : i32, i32
  }
}

</mosaic_0001>

<llo_original>
// kernel: tpu_custom_call.1
$region0: #{tpu_custom_call.1}
  #allocation0 [shape = 'u32[]', space=smem, size = 0x4, offset = 0x4, fixed_abs, tag = 'smem constant byte address 0x4 - core index']
  #allocation1 [shape = 'u32[72,128]{1,0:T(1,128)}', space=vmem, size = 0x9000, scoped, tag = 'internal scratch']
  %s0 = inlined_call_operand.hbm [shape: bf16[16,128], index: 0, kind: input, shape index: {}]
  %s1 = inlined_call_operand.hbm [shape: bf16[128,128], index: 1, kind: input, shape index: {}]
  %s2 = inlined_call_operand.vmem [shape: f32[1,128], index: 2, kind: input, shape index: {}]
  %s3 = inlined_call_operand.hbm [shape: f32[16,128], index: 3, kind: output, shape index: {}]
  %s4 = sld [smem:[#allocation0]]
  $region30: #{tpu_custom_call.1} parent=0
    _
  %s6 = ssub.s32 1, %s4
  %s7 = scalar_select 0, %s6, %s4
  $region1: #{tpu_custom_call.1} parent=0
    #allocation2 [shape = 'u8[4096]{0}', space=vmem, size = 0x1000, scoped, tag = 'input window, operand 0, single buffered']
    #allocation3 [shape = 's32[1]{0}', space=sflag, size = 0x4, scoped, tag = 'scoped memory for tpu_custom_call.1']
    #allocation4 [shape = 's32[1]{0}', space=sflag, size = 0x4, scoped, tag = 'scoped memory for tpu_custom_call.1']
    #allocation5 [shape = 'u8[32768]{0}', space=vmem, size = 0x8000, scoped, tag = 'input window, operand 1, single buffered']
    #allocation6 [shape = 's32[1]{0}', space=sflag, size = 0x4, scoped, tag = 'scoped memory for tpu_custom_call.1']
    #allocation7 [shape = 'u8[8192]{0}', space=vmem, size = 0x2000, scoped, tag = 'output window, operand 0, single buffered']
    %8 = vsyncpa [#allocation3], 0
    %9 = vsyncpa [#allocation6], 0
    %10 = vsyncpa [#allocation4], 0
    // Predicated region
    $region2: #{tpu_custom_call.1} parent=1 // pred_check
      _
    $region3: #{tpu_custom_call.1} parent=1 // pred_check_branch
      %12 = sbr.rel (0) target = $region5
    $region4: #{tpu_custom_call.1} parent=1 // pred_region
      %14 = vsyncadd [#allocation3], 0
      %s15 = sshll.u32 %s0, 4
      %s16 = int_to_ptr.hbm [resolvable:$true] %s15
      %s17 = sshll.u32 [#allocation2], 4
      %s18 = int_to_ptr.vmem [resolvable:$true] %s17
      %23 = dma.hbm_to_vmem [thread:$0]  %s16, 128, %s18, [#allocation3], 64, 64, 4
    $region5: #{tpu_custom_call.1} parent=1 // pred_fallthru
      _
    // Predicated region
    $region6: #{tpu_custom_call.1} parent=1 // pred_check
      _
    $region7: #{tpu_custom_call.1} parent=1 // pred_check_branch
      %25 = sbr.rel (0) target = $region9
    $region8: #{tpu_custom_call.1} parent=1 // pred_region
      %27 = vsyncadd [#allocation6], 0
      %s28 = sshll.u32 %s1, 4
      %s29 = int_to_ptr.hbm [resolvable:$true] %s28
      %s30 = sshll.u32 [#allocation5], 4
      %s31 = int_to_ptr.vmem [resolvable:$true] %s30
      %36 = dma.hbm_to_vmem [thread:$0]  %s29, 1024, %s31, [#allocation6], 64, 64, 4
    $region9: #{tpu_custom_call.1} parent=1 // pred_fallthru
      _
    // Predicated region
    $region10: #{tpu_custom_call.1} parent=1 // pred_check
      _
    $region11: #{tpu_custom_call.1} parent=1 // pred_check_branch
      %38 = sbr.rel (0) target = $region13
    $region12: #{tpu_custom_call.1} parent=1 // pred_region
      _
    $region13: #{tpu_custom_call.1} parent=1 // pred_fallthru
      _
    // Predicated region
    $region14: #{tpu_custom_call.1} parent=1 // pred_check
      _
    $region15: #{tpu_custom_call.1} parent=1 // pred_check_branch
      %40 = sbr.rel (0) target = $region17
    $region16: #{tpu_custom_call.1} parent=1 // pred_region
      %42 = dma.done [#allocation3], 128
    $region17: #{tpu_custom_call.1} parent=1 // pred_fallthru
      _
    // Predicated region
    $region18: #{tpu_custom_call.1} parent=1 // pred_check
      _
    $region19: #{tpu_custom_call.1} parent=1 // pred_check_branch
      %44 = sbr.rel (0) target = $region21
    $region20: #{tpu_custom_call.1} parent=1 // pred_region
      %46 = dma.done [#allocation6], 1024
    $region21: #{tpu_custom_call.1} parent=1 // pred_fallthru
      _
    %v47 = vld [vmem:[#allocation2] sm:$0xf]
    %v48 = vld [vmem:[#allocation2 + $0x4] sm:$0xf]
    %v49 = vld [vmem:[#allocation5] sm:$0xf]
    %v50 = vld [vmem:[#allocation5 + $0x4] sm:$0xf]
    %v51 = vld [vmem:[#allocation5 + $0x8] sm:$0xf]
    %v52 = vld [vmem:[#allocation5 + $0xc] sm:$0xf]
    %v53 = vld [vmem:[#allocation5 + $0x10] sm:$0xf]
    %v54 = vld [vmem:[#allocation5 + $0x14] sm:$0xf]
    %v55 = vld [vmem:[#allocation5 + $0x18] sm:$0xf]
    %v56 = vld [vmem:[#allocation5 + $0x1c] sm:$0xf]
    %v57 = vld [vmem:[#allocation5 + $0x20] sm:$0xf]
    %v58 = vld [vmem:[#allocation5 + $0x24] sm:$0xf]
    %v59 = vld [vmem:[#allocation5 + $0x28] sm:$0xf]
    %v60 = vld [vmem:[#allocation5 + $0x2c] sm:$0xf]
    %v61 = vld [vmem:[#allocation5 + $0x30] sm:$0xf]
    %v62 = vld [vmem:[#allocation5 + $0x34] sm:$0xf]
    %v63 = vld [vmem:[#allocation5 + $0x38] sm:$0xf]
    %v64 = vld [vmem:[#allocation5 + $0x3c] sm:$0xf]
    %v65 = vld [vmem:[%s2] sm:$0x1]
    %v67 = vperm.slane %v65, 0
    %v71 = vunpack.c.l.b16 %v47
    %v72 = vunpack.c.l.b16 %v48
    %v73 = vpack.c.b16 %v72, %v71
    %v91 = vunpack.c.l.b16 %v49
    %v92 = vunpack.c.l.b16 %v50
    %v93 = vunpack.c.l.b16 %v51
    %v94 = vunpack.c.l.b16 %v52
    %v95 = vunpack.c.l.b16 %v53
    %v96 = vunpack.c.l.b16 %v54
    %v97 = vunpack.c.l.b16 %v55
    %v98 = vunpack.c.l.b16 %v56
    %v99 = vunpack.c.l.b16 %v57
    %v100 = vunpack.c.l.b16 %v58
    %v101 = vunpack.c.l.b16 %v59
    %v102 = vunpack.c.l.b16 %v60
    %v103 = vunpack.c.l.b16 %v61
    %v104 = vunpack.c.l.b16 %v62
    %v105 = vunpack.c.l.b16 %v63
    %v106 = vunpack.c.l.b16 %v64
    %v107 = vpack.c.b16 %v92, %v91
    %v108 = vpack.c.b16 %v94, %v93
    %v109 = vpack.c.b16 %v96, %v95
    %v110 = vpack.c.b16 %v98, %v97
    %v111 = vpack.c.b16 %v100, %v99
    %v112 = vpack.c.b16 %v102, %v101
    %v113 = vpack.c.b16 %v104, %v103
    %v114 = vpack.c.b16 %v106, %v105
    %123 = vmatpush.bf16.msra.mxu0 %v114
    %124 = vmatpush.bf16.msra.mxu0 %v113
    %125 = vmatpush.bf16.msra.mxu0 %v112
    %126 = vmatpush.bf16.msra.mxu0 %v111
    %127 = vmatpush.bf16.msra.mxu0 %v110
    %128 = vmatpush.bf16.msra.mxu0 %v109
    %129 = vmatpush.bf16.msra.mxu0 %v108
    %130 = vmatpush.bf16.msra.mxu0 %v107
    %131 = vmatmul.bf16.gmra.mxu0 %v73
    %v132 = vpop.f32.mrf.mxu0
    %v133 = vadd.f32 %v67, %v132
    %v134 = vpop.f32.mrf.mxu0
    %v135 = vadd.f32 %v67, %v134
    %136 = vdwg.mxu0
    %v137 = vtanh.pop %v133
    %v138 = vtanh.pop %v135
    %139 = vst [vmem:[#allocation7] sm:$0xff] %v137
    %140 = vst [vmem:[#allocation7 + $0x8] sm:$0xff] %v138
    // Predicated region
    $region22: #{tpu_custom_call.1} parent=1 // pred_check
      _
    $region23: #{tpu_custom_call.1} parent=1 // pred_check_branch
      %142 = sbr.rel (0) target = $region25
    $region24: #{tpu_custom_call.1} parent=1 // pred_region
      %144 = vsyncadd [#allocation4], 0
      %s145 = sshll.u32 [#allocation7], 4
      %s146 = int_to_ptr.vmem [resolvable:$true] %s145
      %s147 = sshll.u32 %s3, 4
      %s148 = int_to_ptr.hbm [resolvable:$true] %s147
      %153 = dma.vmem_to_hbm [thread:$0]  %s146, 256, %s148, [#allocation4], 128, 128, 8
    $region25: #{tpu_custom_call.1} parent=1 // pred_fallthru
      _
    // Predicated region
    $region26: #{tpu_custom_call.1} parent=1 // pred_check
      _
    $region27: #{tpu_custom_call.1} parent=1 // pred_check_branch
      %155 = sbr.rel (0) target = $region29
    $region28: #{tpu_custom_call.1} parent=1 // pred_region
      %157 = dma.done [#allocation4], 256
    $region29: #{tpu_custom_call.1} parent=1 // pred_fallthru
      _
    %158 = vsyncpa [#allocation3], 1
    %159 = vsyncpa [#allocation6], 1
    %160 = vsyncpa [#allocation4], 1

</llo_original>
